<compile_context>
chip_gen: v6e
topology: v6e:2x2x1
jax: 0.10.0
libtpu: 0.0.40
codegen_flags: <defaults>
</compile_context>

<pallas_src>
import math

import jax
import jax.numpy as jnp
from jax import lax
from jax.experimental import pallas as pl
from jax.experimental.pallas import tpu as pltpu

EPS = 1e-5
KP = 128  # lane-dense (padded) logits width


# --------------------------------------------------------------------------
# Fused kernel factory (all sizes are static / closed over).
# --------------------------------------------------------------------------
def _make_kernel(n_batch, c_ch, length, slot, kp):
    C = c_ch
    width = n_batch * slot                     # packed lane width (128 here)
    inv_cnt = 1.0 / float(n_batch * length)    # BN count (valid cols only)
    r_vec = 3 * C                              # row offsets inside smallp
    r_bc = 4 * C
    r_mask = 4 * C + 1

    def kernel(xp_ref, wcls_ref, sp_ref, out_ref):
        xp = xp_ref[...]                       # (C, width), pad columns zero
        sp = sp_ref[...]                       # (40, width) merged params

        w1big = sp[0:2 * C, 0:3 * C]           # residual(1x1) + conv1 taps
        w2big = sp[2 * C:3 * C, 0:3 * C]       # conv2 taps
        g1 = sp[r_vec:r_vec + C, 0:1]
        be1 = sp[r_vec:r_vec + C, 1:2]
        g2 = sp[r_vec:r_vec + C, 2:3]
        cres = sp[r_vec:r_vec + C, 3:4]        # btr + be2 (pre-summed)
        bc = sp[r_bc:r_bc + 1, 0:kp]           # (1, KP)
        mask = sp[r_mask:r_mask + 1, :]        # (1, width) valid-column mask

        def taps(a):
            # a's padding columns are zero, so the roll wraparound only lands
            # on pad columns and the zeros act as conv zero-padding.
            a_prev = pltpu.roll(a, shift=1, axis=1)           # a[:, p-1] -> p
            a_next = pltpu.roll(a, shift=width - 1, axis=1)   # a[:, p+1] -> p
            return jnp.concatenate([a_prev, a, a_next], axis=0)  # (3C, width)

        # Residual (1x1) + conv1 in ONE MXU push: (2C,3C)@(3C,width).
        rh = jnp.dot(w1big, taps(xp), preferred_element_type=jnp.float32)
        res = rh[0:C, :]                       # wtr @ x
        h1 = rh[C:2 * C, :]                    # conv1(x) (bias dropped: BN kills it)

        # BN1 (batch statistics, one-pass) -> ReLU
        h1m = h1 * mask
        mean1 = jnp.sum(h1m, axis=1, keepdims=True) * inv_cnt
        var1 = jnp.sum(h1 * h1m, axis=1, keepdims=True) * inv_cnt - mean1 * mean1
        scale1 = lax.rsqrt(var1 + EPS) * g1
        y = jnp.maximum(h1 * scale1 + (be1 - mean1 * scale1), 0.0) * mask

        # conv2 (single tap-stacked MXU push) -> BN2 -> residual add -> ReLU
        h2 = jnp.dot(w2big, taps(y), preferred_element_type=jnp.float32)
        h2m = h2 * mask
        mean2 = jnp.sum(h2m, axis=1, keepdims=True) * inv_cnt
        var2 = jnp.sum(h2 * h2m, axis=1, keepdims=True) * inv_cnt - mean2 * mean2
        scale2 = lax.rsqrt(var2 + EPS) * g2
        # z's pad columns hold junk; safe because wcls zeroes those positions.
        z = jnp.maximum(res + cres + (h2 - mean2) * scale2, 0.0)

        # MaxPool1d(2): pooled value for output j lives at odd packed position
        # p = 1 + 2j:  m[:, p] = max(z[:, p], z[:, p+1]).
        m = jnp.maximum(z, pltpu.roll(z, shift=width - 1, axis=1))

        # Fused classifier: ONE (N, C*slot) @ (C*slot, KP) dot. The flatten is
        # built with static slice + concat only (robust Mosaic lowering); the
        # pool selection / flatten order live in wcls' zero pattern.
        rows = []
        for n in range(n_batch):
            base = n * slot
            rows.append(jnp.concatenate(
                [m[c:c + 1, base:base + slot] for c in range(C)], axis=1))
        mflat = jnp.concatenate(rows, axis=0)                # (N, C*slot)
        logits = jnp.dot(mflat, wcls_ref[...],
                         preferred_element_type=jnp.float32)  # (N, KP)
        out_ref[...] = logits + bc                            # lane-dense store

    return kernel


# --------------------------------------------------------------------------
# Parameter packing (done once, outside the hot path): fold layout, tap
# stacking, residual fusion, pooling selection and DMA merging into the
# arrays the kernel consumes.
# --------------------------------------------------------------------------
def pack_params(p, length, n_batch):
    C = p["w1"].shape[1]
    K = p["wc"].shape[1]
    Lo = length // 2
    slot = length + 2
    width = n_batch * slot
    assert width % 128 == 0, "pack examples so the lane width is 128-dense"

    def pad_cc(w):                      # (C, ci) -> (C, C), zero pad columns
        return jnp.pad(w, ((0, 0), (0, C - w.shape[1])))

    # Tap-stacked conv1 weight with the 1x1 residual folded in as extra rows:
    #   rows 0:C   emit  wtr @ x        (middle tap block only)
    #   rows C:2C  emit  conv1(x) = [tap0 | tap1 | tap2] @ [a_prev; a; a_next]
    w1taps = jnp.concatenate([pad_cc(p["w1"][k]) for k in range(3)], axis=1)
    wres = jnp.concatenate(
        [jnp.zeros((C, C), jnp.float32), pad_cc(p["wtr"]),
         jnp.zeros((C, C), jnp.float32)], axis=1)
    w1big = jnp.concatenate([wres, w1taps], axis=0)          # (2C, 3C)
    w2big = jnp.concatenate([pad_cc(p["w2"][k]) for k in range(3)], axis=1)

    # Conv biases b1/b2 dropped: batch-statistic BN subtracts them exactly.
    # Pre-sum btr + be2 (added once on the residual path).
    vecs = jnp.concatenate([p["g1"], p["be1"], p["g2"],
                            p["btr"] + p["be2"]], axis=1)    # (C, 4)

    # Classifier weight: MaxPool1d(2) selection + flatten order c*Lo+j folded
    # in, K zero-padded to 128 lanes, stored lane-dense as (C*slot, KP).
    wc3 = p["wc"].reshape(C, Lo, K)
    wcls = jnp.zeros((C, slot, KP), jnp.float32)
    wcls = wcls.at[:, 1:1 + 2 * Lo:2, :K].set(wc3)
    wcls = wcls.reshape(C * slot, KP)

    bc = jnp.zeros((KP,), jnp.float32).at[:K].set(p["bc"][0])

    # Valid-column mask row (1 on real positions, 0 on per-example padding).
    q = jnp.arange(width) % slot
    maskrow = ((q > 0) & (q < slot - 1)).astype(jnp.float32)

    # Merge ALL small parameters into one lane-dense buffer (one DMA):
    #   rows 0:2C         cols 0:3C -> w1big
    #   rows 2C:3C        cols 0:3C -> w2big
    #   rows 3C:4C        cols 0:4  -> [g1, be1, g2, btr+be2]
    #   row  4C           cols 0:KP -> classifier bias
    #   row  4C+1                   -> valid-column mask
    rows_total = ((4 * C + 2 + 7) // 8) * 8
    smallp = jnp.zeros((rows_total, width), jnp.float32)
    smallp = smallp.at[0:2 * C, 0:3 * C].set(w1big)
    smallp = smallp.at[2 * C:3 * C, 0:3 * C].set(w2big)
    smallp = smallp.at[3 * C:4 * C, 0:4].set(vecs)
    smallp = smallp.at[4 * C, 0:KP].set(bc)
    smallp = smallp.at[4 * C + 1, :].set(maskrow)

    return dict(smallp=smallp, wcls=wcls, n_batch=n_batch, slot=slot,
                C=C, K=K, Kp=KP)


# --------------------------------------------------------------------------
# Wrapper: layout plumbing + single pallas_call.
# --------------------------------------------------------------------------
def net_forward(x, kp):
    N, C_in, L = x.shape
    C, slot, K, Kp = kp["C"], kp["slot"], kp["K"], kp["Kp"]

    # Layout plumbing only: pad channels up to C, add one zero column on each
    # side of every example, and pack the batch into the lane dimension so the
    # kernel sees a single lane-dense (C, N*(L+2)) tile.
    xp = jnp.pad(x, ((0, 0), (0, C - C_in), (1, 1)))           # (N, C, L+2)
    xp = jnp.transpose(xp, (1, 0, 2)).reshape(C, N * slot)     # (C, N*(L+2))

    vmem = pl.BlockSpec(memory_space=pltpu.MemorySpace.VMEM)
    kernel = _make_kernel(N, C, L, slot, Kp)
    # TODO(synk): for large batches, add a grid over batch chunks with
    # dimension_semantics=("parallel",) (uses both v7x TensorCores and
    # amortizes per-call overhead); at N=2 a single grid-less call is optimal.
    logits = pl.pallas_call(
        kernel,
        out_shape=jax.ShapeDtypeStruct((N, Kp), jnp.float32),
        in_specs=[vmem, vmem, vmem],
        out_specs=vmem,
    )(xp, kp["wcls"], kp["smallp"])
    return logits[:, :K]


# --------------------------------------------------------------------------
# Pure-JAX reference (same math as the PyTorch module, no Pallas).
# --------------------------------------------------------------------------
def ref_forward(x, p):
    N, C_in, L = x.shape

    def conv3(inp, w, b):
        xp = jnp.pad(inp, ((0, 0), (0, 0), (1, 1)))
        out = sum(jnp.einsum("oi,nil->nol", w[k], xp[:, :, k:k + L])
                  for k in range(3))
        return out + b[None]

    def bn(h, g, be):
        m = h.mean(axis=(0, 2), keepdims=True)
        v = h.var(axis=(0, 2), keepdims=True)
        return (h - m) / jnp.sqrt(v + EPS) * g[None] + be[None]

    res = jnp.einsum("oi,nil->nol", p["wtr"], x) + p["btr"][None]
    h1 = conv3(x, p["w1"], p["b1"])
    y1 = jnp.maximum(bn(h1, p["g1"], p["be1"]), 0.0)
    h2 = conv3(y1, p["w2"], p["b2"])
    z = jnp.maximum(res + bn(h2, p["g2"], p["be2"]), 0.0)
    pooled = jnp.maximum(z[:, :, 0::2], z[:, :, 1::2])
    flat = pooled.reshape(N, -1)
    return flat @ p["wc"] + p["bc"]


# --------------------------------------------------------------------------
# Deterministic parameter construction (shapes from Net.__init__).
# --------------------------------------------------------------------------
def make_params(key, in_channels, conv_channels, L, num_classes):
    C_in, C = in_channels, conv_channels
    Lo = L // 2
    F = Lo * C
    ks = jax.random.split(key, 8)

    def u(k, shape, fan_in):
        bound = 1.0 / math.sqrt(fan_in)
        return jax.random.uniform(k, shape, jnp.float32, -bound, bound)

    if C_in == C:                                  # Identity transform_input
        wtr = jnp.eye(C, dtype=jnp.float32)
        btr = jnp.zeros((C, 1), jnp.float32)
    else:                                          # Conv1d(C_in, C, k=1)
        wtr = u(ks[0], (C, C_in, 1), C_in)[:, :, 0]
        btr = u(ks[1], (C,), C_in).reshape(C, 1)

    # Conv1d(C_in, C, k=3, p=1) — stored as (3, C_out, C_in) for the kernel
    w1 = jnp.transpose(u(ks[2], (C, C_in, 3), C_in * 3), (2, 0, 1))
    b1 = u(ks[3], (C,), C_in * 3).reshape(C, 1)
    g1 = jnp.ones((C, 1), jnp.float32)             # BatchNorm1d defaults
    be1 = jnp.zeros((C, 1), jnp.float32)
    # Conv1d(C, C, k=3, p=1)
    w2 = jnp.transpose(u(ks[4], (C, C, 3), C * 3), (2, 0, 1))
    b2 = u(ks[5], (C,), C * 3).reshape(C, 1)
    g2 = jnp.ones((C, 1), jnp.float32)
    be2 = jnp.zeros((C, 1), jnp.float32)

    # Classifier: Linear(F -> num_classes), stored as (F, K) / (1, K)
    wc = u(ks[6], (num_classes, F), F).T
    bc = u(ks[7], (num_classes,), F).reshape(1, num_classes)

    return dict(wtr=wtr, btr=btr, w1=w1, b1=b1, g1=g1, be1=be1,
                w2=w2, b2=b2, g2=g2, be2=be2, wc=wc, bc=bc)


if __name__ == "__main__":
    N, C_IN, C, L = 2, 4, 8, 62    # Net(in_channels=4, conv_channels=8, num_blocks=2)
    NUM_CLASSES = 8

    key = jax.random.PRNGKey(0)
    kx, kprm = jax.random.split(key)
    x = jax.random.normal(kx, (N, C_IN, L), jnp.float32)
    params = make_params(kprm, C_IN, C, L, NUM_CLASSES)
    packed = pack_params(params, L, N)

    out = net_forward(x, packed)
    out = jax.block_until_ready(out)

    assert out.shape == (N, NUM_CLASSES)
    ref = ref_forward(x, params)
    assert jnp.allclose(out, ref, rtol=1e-3, atol=1e-3), (out, ref)

    print("KERNEL_OK")
</pallas_src>

<mosaic_0001>
module attributes {stable_mosaic.version = 11 : i64} {
  func.func @kernel(%arg0: memref<8x128xf32, #tpu.memory_space<vmem>>, %arg1: memref<512x128xf32, #tpu.memory_space<vmem>>, %arg2: memref<40x128xf32, #tpu.memory_space<vmem>>, %arg3: memref<2x128xf32, #tpu.memory_space<vmem>>) attributes {dimension_semantics = [], scalar_prefetch = 0 : i64, scratch_operands = 0 : i64, tpu.core_type = #tpu.core_type<tc>} {
    %c0 = arith.constant 0 : index
    %c0_0 = arith.constant 0 : index
    %0 = vector.load %arg0[%c0, %c0_0] : memref<8x128xf32, #tpu.memory_space<vmem>>, vector<8x128xf32>
    %c0_1 = arith.constant 0 : index
    %c0_2 = arith.constant 0 : index
    %1 = vector.load %arg2[%c0_1, %c0_2] : memref<40x128xf32, #tpu.memory_space<vmem>>, vector<40x128xf32>
    %2 = vector.extract_strided_slice %1 {offsets = [0, 0], sizes = [16, 24], strides = [1, 1]} : vector<40x128xf32> to vector<16x24xf32>
    %3 = vector.extract_strided_slice %1 {offsets = [16, 0], sizes = [8, 24], strides = [1, 1]} : vector<40x128xf32> to vector<8x24xf32>
    %4 = vector.extract_strided_slice %1 {offsets = [24, 0], sizes = [8, 1], strides = [1, 1]} : vector<40x128xf32> to vector<8x1xf32>
    %5 = vector.extract_strided_slice %1 {offsets = [24, 1], sizes = [8, 1], strides = [1, 1]} : vector<40x128xf32> to vector<8x1xf32>
    %6 = vector.extract_strided_slice %1 {offsets = [24, 2], sizes = [8, 1], strides = [1, 1]} : vector<40x128xf32> to vector<8x1xf32>
    %7 = vector.extract_strided_slice %1 {offsets = [24, 3], sizes = [8, 1], strides = [1, 1]} : vector<40x128xf32> to vector<8x1xf32>
    %8 = vector.extract_strided_slice %1 {offsets = [32, 0], sizes = [1, 128], strides = [1, 1]} : vector<40x128xf32> to vector<1x128xf32>
    %9 = vector.extract_strided_slice %1 {offsets = [33, 0], sizes = [1, 128], strides = [1, 1]} : vector<40x128xf32> to vector<1x128xf32>
    %c1_i32 = arith.constant 1 : i32
    %10 = tpu.dynamic_rotate %0 by %c1_i32 dim 1 : vector<8x128xf32>, i32 -> vector<8x128xf32>
    %c127_i32 = arith.constant 127 : i32
    %11 = tpu.dynamic_rotate %0 by %c127_i32 dim 1 : vector<8x128xf32>, i32 -> vector<8x128xf32>
    %12 = tpu.concatenate %10, %0, %11 in 0 : vector<8x128xf32>, vector<8x128xf32>, vector<8x128xf32> -> vector<24x128xf32>
    %cst = arith.constant dense<0.000000e+00> : vector<16x128xf32>
    %13 = tpu.matmul %2, %12, %cst {dimension_numbers = #tpu.dot_dimension_numbers<[1], [0], [0], [1], [0, 0, 1, 1], [], []>} : vector<16x24xf32>, vector<24x128xf32>, vector<16x128xf32> -> vector<16x128xf32>
    %14 = vector.extract_strided_slice %13 {offsets = [0, 0], sizes = [8, 128], strides = [1, 1]} : vector<16x128xf32> to vector<8x128xf32>
    %15 = vector.extract_strided_slice %13 {offsets = [8, 0], sizes = [8, 128], strides = [1, 1]} : vector<16x128xf32> to vector<8x128xf32>
    %16 = vector.broadcast %9 : vector<1x128xf32> to vector<8x128xf32>
    %17 = arith.mulf %15, %16 : vector<8x128xf32>
    %cst_3 = arith.constant dense<0.000000e+00> : vector<8xf32>
    %18 = vector.multi_reduction <add>, %17, %cst_3 [1] : vector<8x128xf32> to vector<8xf32>
    %19 = vector.shape_cast %18 : vector<8xf32> to vector<8x1xf32>
    %cst_4 = arith.constant 0.00806451589 : f32
    %20 = vector.broadcast %cst_4 : f32 to vector<8x1xf32>
    %21 = arith.mulf %19, %20 : vector<8x1xf32>
    %22 = arith.mulf %15, %17 : vector<8x128xf32>
    %cst_5 = arith.constant dense<0.000000e+00> : vector<8xf32>
    %23 = vector.multi_reduction <add>, %22, %cst_5 [1] : vector<8x128xf32> to vector<8xf32>
    %24 = vector.shape_cast %23 : vector<8xf32> to vector<8x1xf32>
    %cst_6 = arith.constant 0.00806451589 : f32
    %25 = vector.broadcast %cst_6 : f32 to vector<8x1xf32>
    %26 = arith.mulf %24, %25 : vector<8x1xf32>
    %27 = arith.mulf %21, %21 : vector<8x1xf32>
    %28 = arith.subf %26, %27 : vector<8x1xf32>
    %cst_7 = arith.constant 9.99999974E-6 : f32
    %29 = vector.broadcast %cst_7 : f32 to vector<8x1xf32>
    %30 = arith.addf %28, %29 : vector<8x1xf32>
    %31 = math.rsqrt %30 : vector<8x1xf32>
    %32 = arith.mulf %31, %4 : vector<8x1xf32>
    %33 = vector.broadcast %32 : vector<8x1xf32> to vector<8x128xf32>
    %34 = arith.mulf %15, %33 : vector<8x128xf32>
    %35 = arith.mulf %21, %32 : vector<8x1xf32>
    %36 = arith.subf %5, %35 : vector<8x1xf32>
    %37 = vector.broadcast %36 : vector<8x1xf32> to vector<8x128xf32>
    %38 = arith.addf %34, %37 : vector<8x128xf32>
    %cst_8 = arith.constant 0.000000e+00 : f32
    %39 = vector.broadcast %cst_8 : f32 to vector<8x128xf32>
    %40 = arith.maximumf %38, %39 : vector<8x128xf32>
    %41 = vector.broadcast %9 : vector<1x128xf32> to vector<8x128xf32>
    %42 = arith.mulf %40, %41 : vector<8x128xf32>
    %c1_i32_9 = arith.constant 1 : i32
    %43 = tpu.dynamic_rotate %42 by %c1_i32_9 dim 1 : vector<8x128xf32>, i32 -> vector<8x128xf32>
    %c127_i32_10 = arith.constant 127 : i32
    %44 = tpu.dynamic_rotate %42 by %c127_i32_10 dim 1 : vector<8x128xf32>, i32 -> vector<8x128xf32>
    %45 = tpu.concatenate %43, %42, %44 in 0 : vector<8x128xf32>, vector<8x128xf32>, vector<8x128xf32> -> vector<24x128xf32>
    %cst_11 = arith.constant dense<0.000000e+00> : vector<8x128xf32>
    %46 = tpu.matmul %3, %45, %cst_11 {dimension_numbers = #tpu.dot_dimension_numbers<[1], [0], [0], [1], [0, 0, 1, 1], [], []>} : vector<8x24xf32>, vector<24x128xf32>, vector<8x128xf32> -> vector<8x128xf32>
    %47 = vector.broadcast %9 : vector<1x128xf32> to vector<8x128xf32>
    %48 = arith.mulf %46, %47 : vector<8x128xf32>
    %cst_12 = arith.constant dense<0.000000e+00> : vector<8xf32>
    %49 = vector.multi_reduction <add>, %48, %cst_12 [1] : vector<8x128xf32> to vector<8xf32>
    %50 = vector.shape_cast %49 : vector<8xf32> to vector<8x1xf32>
    %cst_13 = arith.constant 0.00806451589 : f32
    %51 = vector.broadcast %cst_13 : f32 to vector<8x1xf32>
    %52 = arith.mulf %50, %51 : vector<8x1xf32>
    %53 = arith.mulf %46, %48 : vector<8x128xf32>
    %cst_14 = arith.constant dense<0.000000e+00> : vector<8xf32>
    %54 = vector.multi_reduction <add>, %53, %cst_14 [1] : vector<8x128xf32> to vector<8xf32>
    %55 = vector.shape_cast %54 : vector<8xf32> to vector<8x1xf32>
    %cst_15 = arith.constant 0.00806451589 : f32
    %56 = vector.broadcast %cst_15 : f32 to vector<8x1xf32>
    %57 = arith.mulf %55, %56 : vector<8x1xf32>
    %58 = arith.mulf %52, %52 : vector<8x1xf32>
    %59 = arith.subf %57, %58 : vector<8x1xf32>
    %cst_16 = arith.constant 9.99999974E-6 : f32
    %60 = vector.broadcast %cst_16 : f32 to vector<8x1xf32>
    %61 = arith.addf %59, %60 : vector<8x1xf32>
    %62 = math.rsqrt %61 : vector<8x1xf32>
    %63 = arith.mulf %62, %6 : vector<8x1xf32>
    %64 = vector.broadcast %7 : vector<8x1xf32> to vector<8x128xf32>
    %65 = arith.addf %14, %64 : vector<8x128xf32>
    %66 = vector.broadcast %52 : vector<8x1xf32> to vector<8x128xf32>
    %67 = arith.subf %46, %66 : vector<8x128xf32>
    %68 = vector.broadcast %63 : vector<8x1xf32> to vector<8x128xf32>
    %69 = arith.mulf %67, %68 : vector<8x128xf32>
    %70 = arith.addf %65, %69 : vector<8x128xf32>
    %cst_17 = arith.constant 0.000000e+00 : f32
    %71 = vector.broadcast %cst_17 : f32 to vector<8x128xf32>
    %72 = arith.maximumf %70, %71 : vector<8x128xf32>
    %c127_i32_18 = arith.constant 127 : i32
    %73 = tpu.dynamic_rotate %72 by %c127_i32_18 dim 1 : vector<8x128xf32>, i32 -> vector<8x128xf32>
    %74 = arith.maximumf %72, %73 : vector<8x128xf32>
    %75 = vector.extract_strided_slice %74 {offsets = [0, 0], sizes = [1, 64], strides = [1, 1]} : vector<8x128xf32> to vector<1x64xf32>
    %76 = vector.extract_strided_slice %74 {offsets = [1, 0], sizes = [1, 64], strides = [1, 1]} : vector<8x128xf32> to vector<1x64xf32>
    %77 = vector.extract_strided_slice %74 {offsets = [2, 0], sizes = [1, 64], strides = [1, 1]} : vector<8x128xf32> to vector<1x64xf32>
    %78 = vector.extract_strided_slice %74 {offsets = [3, 0], sizes = [1, 64], strides = [1, 1]} : vector<8x128xf32> to vector<1x64xf32>
    %79 = vector.extract_strided_slice %74 {offsets = [4, 0], sizes = [1, 64], strides = [1, 1]} : vector<8x128xf32> to vector<1x64xf32>
    %80 = vector.extract_strided_slice %74 {offsets = [5, 0], sizes = [1, 64], strides = [1, 1]} : vector<8x128xf32> to vector<1x64xf32>
    %81 = vector.extract_strided_slice %74 {offsets = [6, 0], sizes = [1, 64], strides = [1, 1]} : vector<8x128xf32> to vector<1x64xf32>
    %82 = vector.extract_strided_slice %74 {offsets = [7, 0], sizes = [1, 64], strides = [1, 1]} : vector<8x128xf32> to vector<1x64xf32>
    %83 = tpu.concatenate %75, %76, %77, %78, %79, %80, %81, %82 in 1 : vector<1x64xf32>, vector<1x64xf32>, vector<1x64xf32>, vector<1x64xf32>, vector<1x64xf32>, vector<1x64xf32>, vector<1x64xf32>, vector<1x64xf32> -> vector<1x512xf32>
    %84 = vector.extract_strided_slice %74 {offsets = [0, 64], sizes = [1, 64], strides = [1, 1]} : vector<8x128xf32> to vector<1x64xf32>
    %85 = vector.extract_strided_slice %74 {offsets = [1, 64], sizes = [1, 64], strides = [1, 1]} : vector<8x128xf32> to vector<1x64xf32>
    %86 = vector.extract_strided_slice %74 {offsets = [2, 64], sizes = [1, 64], strides = [1, 1]} : vector<8x128xf32> to vector<1x64xf32>
    %87 = vector.extract_strided_slice %74 {offsets = [3, 64], sizes = [1, 64], strides = [1, 1]} : vector<8x128xf32> to vector<1x64xf32>
    %88 = vector.extract_strided_slice %74 {offsets = [4, 64], sizes = [1, 64], strides = [1, 1]} : vector<8x128xf32> to vector<1x64xf32>
    %89 = vector.extract_strided_slice %74 {offsets = [5, 64], sizes = [1, 64], strides = [1, 1]} : vector<8x128xf32> to vector<1x64xf32>
    %90 = vector.extract_strided_slice %74 {offsets = [6, 64], sizes = [1, 64], strides = [1, 1]} : vector<8x128xf32> to vector<1x64xf32>
    %91 = vector.extract_strided_slice %74 {offsets = [7, 64], sizes = [1, 64], strides = [1, 1]} : vector<8x128xf32> to vector<1x64xf32>
    %92 = tpu.concatenate %84, %85, %86, %87, %88, %89, %90, %91 in 1 : vector<1x64xf32>, vector<1x64xf32>, vector<1x64xf32>, vector<1x64xf32>, vector<1x64xf32>, vector<1x64xf32>, vector<1x64xf32>, vector<1x64xf32> -> vector<1x512xf32>
    %93 = tpu.concatenate %83, %92 in 0 : vector<1x512xf32>, vector<1x512xf32> -> vector<2x512xf32>
    %c0_19 = arith.constant 0 : index
    %c0_20 = arith.constant 0 : index
    %94 = vector.load %arg1[%c0_19, %c0_20] : memref<512x128xf32, #tpu.memory_space<vmem>>, vector<512x128xf32>
    %cst_21 = arith.constant dense<0.000000e+00> : vector<2x128xf32>
    %95 = tpu.matmul %93, %94, %cst_21 {dimension_numbers = #tpu.dot_dimension_numbers<[1], [0], [0], [1], [0, 0, 1, 1], [], []>} : vector<2x512xf32>, vector<512x128xf32>, vector<2x128xf32> -> vector<2x128xf32>
    %96 = vector.broadcast %8 : vector<1x128xf32> to vector<2x128xf32>
    %97 = arith.addf %95, %96 : vector<2x128xf32>
    %c0_22 = arith.constant 0 : index
    %c0_23 = arith.constant 0 : index
    %98 = vector.load %arg3[%c0_22, %c0_23] : memref<2x128xf32, #tpu.memory_space<vmem>>, vector<2x128xf32>
    tpu.vector_store %arg3[%c0_22, %c0_23], %97 {strides = array<i32>} : memref<2x128xf32, #tpu.memory_space<vmem>>, vector<2x128xf32>,
    return
  }
}

</mosaic_0001>

<llo_original>
// kernel: tpu_custom_call.1
$region0: #{tpu_custom_call.1}
  #allocation0 [shape = 'u32[]', space=smem, size = 0x4, offset = 0x4, fixed_abs, tag = 'smem constant byte address 0x4 - core index']
  #allocation1 [shape = 'u32[144,128]{1,0:T(1,128)}', space=vmem, size = 0x12000, scoped, tag = 'internal scratch']
  %s0 = inlined_call_operand.hbm [shape: f32[8,128], index: 0, kind: input, shape index: {}]
  %s1 = inlined_call_operand.hbm [shape: f32[512,128], index: 1, kind: input, shape index: {}]
  %s2 = inlined_call_operand.hbm [shape: f32[40,128], index: 2, kind: input, shape index: {}]
  %s3 = inlined_call_operand.hbm [shape: f32[2,128], index: 3, kind: output, shape index: {}]
  %s4 = sld [smem:[#allocation0]]
  $region34: #{tpu_custom_call.1} parent=0
    _
  %s6 = ssub.s32 1, %s4
  %s7 = scalar_select 0, %s6, %s4
  $region1: #{tpu_custom_call.1} parent=0
    #allocation2 [shape = 'u8[4096]{0}', space=vmem, size = 0x1000, scoped, tag = 'input window, operand 0, single buffered']
    #allocation3 [shape = 's32[1]{0}', space=sflag, size = 0x4, scoped, tag = 'scoped memory for tpu_custom_call.1']
    #allocation4 [shape = 's32[1]{0}', space=sflag, size = 0x4, scoped, tag = 'scoped memory for tpu_custom_call.1']
    #allocation5 [shape = 'u8[262144]{0}', space=vmem, size = 0x40000, scoped, tag = 'input window, operand 1, single buffered']
    #allocation6 [shape = 's32[1]{0}', space=sflag, size = 0x4, scoped, tag = 'scoped memory for tpu_custom_call.1']
    #allocation7 [shape = 'u8[20480]{0}', space=vmem, size = 0x5000, scoped, tag = 'input window, operand 2, single buffered']
    #allocation8 [shape = 'u8[1024]{0}', space=vmem, size = 0x400, scoped, tag = 'output window, operand 0, single buffered']
    %8 = vsyncpa [#allocation3], 0
    %9 = vsyncpa [#allocation6], 0
    %10 = vsyncpa [#allocation4], 0
    // Predicated region
    $region2: #{tpu_custom_call.1} parent=1 // pred_check
      _
    $region3: #{tpu_custom_call.1} parent=1 // pred_check_branch
      %12 = sbr.rel (0) target = $region5
    $region4: #{tpu_custom_call.1} parent=1 // pred_region
      %s14 = ssub.s32 128, 128
      %15 = vsyncadd [#allocation3], %s14
      %s17 = sshll.u32 [#allocation2], 4
      %s18 = int_to_ptr.vmem [resolvable:$true] %s17
      %20 = dma.hbm_to_vmem [thread:$0]  %s0, 128, %s18, [#allocation3]
    $region5: #{tpu_custom_call.1} parent=1 // pred_fallthru
      _
    // Predicated region
    $region6: #{tpu_custom_call.1} parent=1 // pred_check
      _
    $region7: #{tpu_custom_call.1} parent=1 // pred_check_branch
      %22 = sbr.rel (0) target = $region9
    $region8: #{tpu_custom_call.1} parent=1 // pred_region
      %s24 = ssub.s32 8192, 8192
      %25 = vsyncadd [#allocation6], %s24
      %s26 = sshll.u32 [#allocation5], 4
      %s27 = int_to_ptr.vmem [resolvable:$true] %s26
      %32 = dma.hbm_to_vmem [thread:$0]  %s1, 8192, %s27, [#allocation6], 128, 128, 8
    $region9: #{tpu_custom_call.1} parent=1 // pred_fallthru
      _
    // Predicated region
    $region10: #{tpu_custom_call.1} parent=1 // pred_check
      _
    $region11: #{tpu_custom_call.1} parent=1 // pred_check_branch
      %34 = sbr.rel (0) target = $region13
    $region12: #{tpu_custom_call.1} parent=1 // pred_region
      %s36 = ssub.s32 640, 640
      %37 = vsyncadd [#allocation6], %s36
      %s38 = sshll.u32 [#allocation7], 4
      %s39 = int_to_ptr.vmem [resolvable:$true] %s38
      %44 = dma.hbm_to_vmem [thread:$0]  %s2, 640, %s39, [#allocation6], 128, 128, 8
    $region13: #{tpu_custom_call.1} parent=1 // pred_fallthru
      _
    // Predicated region
    $region14: #{tpu_custom_call.1} parent=1 // pred_check
      _
    $region15: #{tpu_custom_call.1} parent=1 // pred_check_branch
      %46 = sbr.rel (0) target = $region17
    $region16: #{tpu_custom_call.1} parent=1 // pred_region
      %47 = dma.done [#allocation3], 128
    $region17: #{tpu_custom_call.1} parent=1 // pred_fallthru
      _
    // Predicated region
    $region18: #{tpu_custom_call.1} parent=1 // pred_check
      _
    $region19: #{tpu_custom_call.1} parent=1 // pred_check_branch
      %49 = sbr.rel (0) target = $region21
    $region20: #{tpu_custom_call.1} parent=1 // pred_region
      %50 = dma.done [#allocation6], 8192
    $region21: #{tpu_custom_call.1} parent=1 // pred_fallthru
      _
    // Predicated region
    $region22: #{tpu_custom_call.1} parent=1 // pred_check
      _
    $region23: #{tpu_custom_call.1} parent=1 // pred_check_branch
      %52 = sbr.rel (0) target = $region25
    $region24: #{tpu_custom_call.1} parent=1 // pred_region
      %53 = dma.done [#allocation6], 640
    $region25: #{tpu_custom_call.1} parent=1 // pred_fallthru
      _
    %v54 = vld [vmem:[#allocation2] sm:$0xff]
    %v55 = vld [vmem:[#allocation7] sm:$0xff]
    %v56 = vld [vmem:[#allocation7 + $0x8] sm:$0xff]
    %v57 = vld [vmem:[#allocation7 + $0x10] sm:$0xff]
    %v58 = vld [vmem:[#allocation7 + $0x18] sm:$0xff]
    %v59 = vld [vmem:[#allocation7 + $0x20] sm:$0xff]
    %60 = vrot.lane.b32.xlu0 %v54, 1
    %v61 = vpop.permute.xlu0 %60
    %62 = vrot.lane.b32.xlu0 %v54, 127
    %v63 = vpop.permute.xlu0 %62
    %vm64 = vcmask 195584
    %v66 = vsel %vm64, %v55, 0
    %v69 = vsel %vm64, %v56, 0
    %71 = vmatprep.subr.mxu0 0.0
    %72 = vmatpush1.msra.mxu0 0.0
    %73 = vmatprep.subr.mxu0 0.0
    %74 = vmatpush1.msra.mxu0 0.0
    %75 = vmatprep.subr.mxu0 0.0
    %76 = vmatpush1.msra.mxu0 0.0
    %77 = vmatprep.subr.mxu0 0.0
    %78 = vmatpush1.msra.mxu0 0.0
    %79 = vmatprep.subr.mxu0 0.0
    %80 = vmatpush1.msra.mxu0 0.0
    %81 = vmatprep.subr.mxu0 0.0
    %82 = vmatpush1.msra.mxu0 0.0
    %83 = vmatprep.subr.mxu0 0.0
    %84 = vmatpush1.msra.mxu0 0.0
    %85 = vmatprep.subr.mxu0 0.0
    %86 = vmatpush1.msra.mxu0 0.0
    %87 = vmatprep.subr.mxu0 0.0
    %88 = vmatpush1.msra.mxu0 0.0
    %89 = vmatprep.subr.mxu0 0.0
    %90 = vmatpush1.msra.mxu0 0.0
    %91 = vmatprep.subr.mxu0 0.0
    %92 = vmatpush1.msra.mxu0 0.0
    %93 = vmatprep.subr.mxu0 0.0
    %94 = vmatpush1.msra.mxu0 0.0
    %95 = vmatprep.subr.mxu0 0.0
    %96 = vmatpush1.msra.mxu0 0.0
    %97 = vmatprep.subr.mxu0 0.0
    %98 = vmatpush1.msra.mxu0 %v63
    %99 = vmatprep.subr.mxu0 0.0
    %100 = vmatpush1.msra.mxu0 %v54
    %101 = vmatprep.subr.mxu0 0.0
    %102 = vmatpush1.msra.mxu0 %v61
    %103 = vmatprep.subr.mxu0 0.0
    %104 = vmatpush2.msra.mxu0 0.0
    %105 = vmatprep.subr.mxu0 0.0
    %106 = vmatpush2.msra.mxu0 0.0
    %107 = vmatprep.subr.mxu0 0.0
    %108 = vmatpush2.msra.mxu0 0.0
    %109 = vmatprep.subr.mxu0 0.0
    %110 = vmatpush2.msra.mxu0 0.0
    %111 = vmatprep.subr.mxu0 0.0
    %112 = vmatpush2.msra.mxu0 0.0
    %113 = vmatprep.subr.mxu0 0.0
    %114 = vmatpush2.msra.mxu0 0.0
    %115 = vmatprep.subr.mxu0 0.0
    %116 = vmatpush2.msra.mxu0 0.0
    %117 = vmatprep.subr.mxu0 0.0
    %118 = vmatpush2.msra.mxu0 0.0
    %119 = vmatprep.subr.mxu0 0.0
    %120 = vmatpush2.msra.mxu0 0.0
    %121 = vmatprep.subr.mxu0 0.0
    %122 = vmatpush2.msra.mxu0 0.0
    %123 = vmatprep.subr.mxu0 0.0
    %124 = vmatpush2.msra.mxu0 0.0
    %125 = vmatprep.subr.mxu0 0.0
    %126 = vmatpush2.msra.mxu0 0.0
    %127 = vmatprep.subr.mxu0 0.0
    %128 = vmatpush2.msra.mxu0 0.0
    %129 = vmatprep.subr.mxu0 0.0
    %130 = vmatpush2.msra.mxu0 0.0
    %131 = vmatprep.subr.mxu0 0.0
    %132 = vmatpush2.msra.mxu0 0.0
    %133 = vmatprep.subr.mxu0 0.0
    %134 = vmatpush2.msra.mxu0 0.0
    %135 = vmatprep.mubr.f32.mxu0 0.0
    %136 = vmatmul.mubr.f32.gmra.mxu0 %v66
    %v137 = vpop.f32.mrf.mxu0
    %v138 = vadd.f32 0.0, %v137
    %v139 = vpop.f32.mrf.mxu0
    %140 = vmatprep.mubr.f32.mxu0 0.0
    %141 = vmatmul.mubr.f32.gmra.mxu0 %v69
    %v142 = vpop.f32.mrf.mxu0
    %v143 = vadd.f32 0.0, %v142
    %v144 = vpop.f32.mrf.mxu0
    %145 = vdwg.mxu0
    %v146 = vlaneseq
    %v147 = vshrl.u32 %v146, 7
    %v148 = vsub.s32 1, %v147
    %v149 = vrot.slane %v59, %v148
    %v150 = vmul.f32 %v143, %v149
    %151 = vadd.xlane.f32.xlu0 %v150
    %v152 = vpop.xlane.xlu0 %151
    %v153 = vmul.f32 %v152, 0.008064516
    %v154 = vmul.f32 %v143, %v150
    %155 = vadd.xlane.f32.xlu0 %v154
    %v156 = vpop.xlane.xlu0 %155
    %v157 = vmul.f32 %v156, 0.008064516
    %v158 = vmul.f32 %v153, %v153
    %v159 = vsub.f32 %v157, %v158
    %v160 = vadd.f32 %v159, 1e-05
    %v161 = vrsqrt.pop %v160
    %v162 = vmul.f32 %v161, %v58
    %164 = vset.pattern.permute.xlu0 0
    %165 = vperm.xlu0 %164, %v162
    %v166 = vpop.permute.xlu0 %165
    %v168 = vmul.f32 %v143, %v166
    %v169 = vmul.f32 %v153, %v162
    %171 = vrot.lane.b32.xlu0 %v169, 1
    %v172 = vpop.permute.xlu0 %171
    %v174 = vsub.f32 %v58, %v172
    %176 = vset.pattern.permute.xlu0 1
    %177 = vperm.xlu0 %176, %v174
    %v178 = vpop.permute.xlu0 %177
    %v180 = vadd.f32 %v168, %v178
    %v181 = vmax.f32 %v180, 0.0
    %v182 = vmul.f32 %v181, %v149
    %183 = vrot.lane.b32.xlu0 %v182, 1
    %v184 = vpop.permute.xlu0 %183
    %185 = vrot.lane.b32.xlu0 %v182, 127
    %v186 = vpop.permute.xlu0 %185
    %v188 = vsel %vm64, %v57, 0
    %190 = vmatprep.subr.mxu0 0.0
    %191 = vmatpush1.msra.mxu0 0.0
    %192 = vmatprep.subr.mxu0 0.0
    %193 = vmatpush1.msra.mxu0 0.0
    %194 = vmatprep.subr.mxu0 0.0
    %195 = vmatpush1.msra.mxu0 0.0
    %196 = vmatprep.subr.mxu0 0.0
    %197 = vmatpush1.msra.mxu0 0.0
    %198 = vmatprep.subr.mxu0 0.0
    %199 = vmatpush1.msra.mxu0 0.0
    %200 = vmatprep.subr.mxu0 0.0
    %201 = vmatpush1.msra.mxu0 0.0
    %202 = vmatprep.subr.mxu0 0.0
    %203 = vmatpush1.msra.mxu0 0.0
    %204 = vmatprep.subr.mxu0 0.0
    %205 = vmatpush1.msra.mxu0 0.0
    %206 = vmatprep.subr.mxu0 0.0
    %207 = vmatpush1.msra.mxu0 0.0
    %208 = vmatprep.subr.mxu0 0.0
    %209 = vmatpush1.msra.mxu0 0.0
    %210 = vmatprep.subr.mxu0 0.0
    %211 = vmatpush1.msra.mxu0 0.0
    %212 = vmatprep.subr.mxu0 0.0
    %213 = vmatpush1.msra.mxu0 0.0
    %214 = vmatprep.subr.mxu0 0.0
    %215 = vmatpush1.msra.mxu0 0.0
    %216 = vmatprep.subr.mxu0 0.0
    %217 = vmatpush1.msra.mxu0 %v186
    %218 = vmatprep.subr.mxu0 0.0
    %219 = vmatpush1.msra.mxu0 %v182
    %220 = vmatprep.subr.mxu0 0.0
    %221 = vmatpush1.msra.mxu0 %v184
    %222 = vmatprep.subr.mxu0 0.0
    %223 = vmatpush2.msra.mxu0 0.0
    %224 = vmatprep.subr.mxu0 0.0
    %225 = vmatpush2.msra.mxu0 0.0
    %226 = vmatprep.subr.mxu0 0.0
    %227 = vmatpush2.msra.mxu0 0.0
    %228 = vmatprep.subr.mxu0 0.0
    %229 = vmatpush2.msra.mxu0 0.0
    %230 = vmatprep.subr.mxu0 0.0
    %231 = vmatpush2.msra.mxu0 0.0
    %232 = vmatprep.subr.mxu0 0.0
    %233 = vmatpush2.msra.mxu0 0.0
    %234 = vmatprep.subr.mxu0 0.0
    %235 = vmatpush2.msra.mxu0 0.0
    %236 = vmatprep.subr.mxu0 0.0
    %237 = vmatpush2.msra.mxu0 0.0
    %238 = vmatprep.subr.mxu0 0.0
    %239 = vmatpush2.msra.mxu0 0.0
    %240 = vmatprep.subr.mxu0 0.0
    %241 = vmatpush2.msra.mxu0 0.0
    %242 = vmatprep.subr.mxu0 0.0
    %243 = vmatpush2.msra.mxu0 0.0
    %244 = vmatprep.subr.mxu0 0.0
    %245 = vmatpush2.msra.mxu0 0.0
    %246 = vmatprep.subr.mxu0 0.0
    %247 = vmatpush2.msra.mxu0 0.0
    %248 = vmatprep.subr.mxu0 0.0
    %249 = vmatpush2.msra.mxu0 0.0
    %250 = vmatprep.subr.mxu0 0.0
    %251 = vmatpush2.msra.mxu0 0.0
    %252 = vmatprep.subr.mxu0 0.0
    %253 = vmatpush2.msra.mxu0 0.0
    %254 = vmatprep.mubr.f32.mxu0 0.0
    %255 = vmatmul.mubr.f32.gmra.mxu0 %v188
    %v256 = vpop.f32.mrf.mxu0
    %v257 = vadd.f32 0.0, %v256
    %v258 = vpop.f32.mrf.mxu0
    %259 = vdwg.mxu0
    %v260 = vmul.f32 %v257, %v149
    %261 = vadd.xlane.f32.xlu0 %v260
    %v262 = vpop.xlane.xlu0 %261
    %v263 = vmul.f32 %v262, 0.008064516
    %v264 = vmul.f32 %v257, %v260
    %265 = vadd.xlane.f32.xlu0 %v264
    %v266 = vpop.xlane.xlu0 %265
    %v267 = vmul.f32 %v266, 0.008064516
    %v268 = vmul.f32 %v263, %v263
    %v269 = vsub.f32 %v267, %v268
    %v270 = vadd.f32 %v269, 1e-05
    %v271 = vrsqrt.pop %v270
    %v272 = vmul.f32 %v271, %v58
    %274 = vset.pattern.permute.xlu0 3
    %275 = vperm.xlu0 %274, %v58
    %v276 = vpop.permute.xlu0 %275
    %v278 = vadd.f32 %v138, %v276
    %v279 = vsub.f32 %v257, %v263
    %281 = vset.pattern.permute.xlu0 2
    %282 = vperm.xlu0 %281, %v272
    %v283 = vpop.permute.xlu0 %282
    %v285 = vmul.f32 %v279, %v283
    %v286 = vadd.f32 %v278, %v285
    %v287 = vmax.f32 %v286, 0.0
    %288 = vrot.lane.b32.xlu0 %v287, 127
    %v289 = vpop.permute.xlu0 %288
    %v290 = vmax.f32 %v287, %v289
    %v292 = vrot.slane %v290, 1
    %293 = vrot.lane.b32.xlu0 %v292, 64
    %v294 = vpop.permute.xlu0 %293
    %v296 = vrot.slane %v290, 2
    %v298 = vrot.slane %v290, 3
    %299 = vrot.lane.b32.xlu0 %v298, 64
    %v300 = vpop.permute.xlu0 %299
    %v302 = vrot.slane %v290, 4
    %v304 = vrot.slane %v290, 5
    %305 = vrot.lane.b32.xlu0 %v304, 64
    %v306 = vpop.permute.xlu0 %305
    %v308 = vrot.slane %v290, 6
    %v310 = vrot.slane %v290, 7
    %311 = vrot.lane.b32.xlu0 %v310, 64
    %v312 = vpop.permute.xlu0 %311
    %vm314 = vcmask 523264
    %v315 = vsel %vm314, %v290, %v294
    %v316 = vsel %vm314, %v296, %v300
    %v317 = vsel %vm314, %v302, %v306
    %v318 = vsel %vm314, %v308, %v312
    %319 = vrot.lane.b32.xlu0 %v290, 64
    %v320 = vpop.permute.xlu0 %319
    %323 = vrot.lane.b32.xlu0 %v296, 64
    %v324 = vpop.permute.xlu0 %323
    %327 = vrot.lane.b32.xlu0 %v302, 64
    %v328 = vpop.permute.xlu0 %327
    %331 = vrot.lane.b32.xlu0 %v308, 64
    %v332 = vpop.permute.xlu0 %331
    %v335 = vsel %vm314, %v320, %v292
    %v336 = vsel %vm314, %v324, %v298
    %v337 = vsel %vm314, %v328, %v304
    %v338 = vsel %vm314, %v332, %v310
    %v343 = vrot.slane %v335, 7
    %v344 = vrot.slane %v336, 7
    %v345 = vrot.slane %v337, 7
    %v346 = vrot.slane %v338, 7
    %vm351 = vcmask 1040384
    %v352 = vsel %vm351, %v315, %v343
    %v353 = vsel %vm351, %v316, %v344
    %v354 = vsel %vm351, %v317, %v345
    %v355 = vsel %vm351, %v318, %v346
    %v356 = vld [vmem:[#allocation5] sm:$0xff]
    %v357 = vld [vmem:[#allocation5 + $0x8] sm:$0xff]
    %v358 = vld [vmem:[#allocation5 + $0x10] sm:$0xff]
    %v359 = vld [vmem:[#allocation5 + $0x18] sm:$0xff]
    %v360 = vld [vmem:[#allocation5 + $0x20] sm:$0xff]
    %v361 = vld [vmem:[#allocation5 + $0x28] sm:$0xff]
    %v362 = vld [vmem:[#allocation5 + $0x30] sm:$0xff]
    %v363 = vld [vmem:[#allocation5 + $0x38] sm:$0xff]
    %v364 = vld [vmem:[#allocation5 + $0x40] sm:$0xff]
    %v365 = vld [vmem:[#allocation5 + $0x48] sm:$0xff]
    %v366 = vld [vmem:[#allocation5 + $0x50] sm:$0xff]
    %v367 = vld [vmem:[#allocation5 + $0x58] sm:$0xff]
    %v368 = vld [vmem:[#allocation5 + $0x60] sm:$0xff]
    %v369 = vld [vmem:[#allocation5 + $0x68] sm:$0xff]
    %v370 = vld [vmem:[#allocation5 + $0x70] sm:$0xff]
    %v371 = vld [vmem:[#allocation5 + $0x78] sm:$0xff]
    %v372 = vld [vmem:[#allocation5 + $0x80] sm:$0xff]
    %v373 = vld [vmem:[#allocation5 + $0x88] sm:$0xff]
    %v374 = vld [vmem:[#allocation5 + $0x90] sm:$0xff]
    %v375 = vld [vmem:[#allocation5 + $0x98] sm:$0xff]
    %v376 = vld [vmem:[#allocation5 + $0xa0] sm:$0xff]
    %v377 = vld [vmem:[#allocation5 + $0xa8] sm:$0xff]
    %v378 = vld [vmem:[#allocation5 + $0xb0] sm:$0xff]
    %v379 = vld [vmem:[#allocation5 + $0xb8] sm:$0xff]
    %v380 = vld [vmem:[#allocation5 + $0xc0] sm:$0xff]
    %v381 = vld [vmem:[#allocation5 + $0xc8] sm:$0xff]
    %v382 = vld [vmem:[#allocation5 + $0xd0] sm:$0xff]
    %v383 = vld [vmem:[#allocation5 + $0xd8] sm:$0xff]
    %v384 = vld [vmem:[#allocation5 + $0xe0] sm:$0xff]
    %v385 = vld [vmem:[#allocation5 + $0xe8] sm:$0xff]
    %v386 = vld [vmem:[#allocation5 + $0xf0] sm:$0xff]
    %v387 = vld [vmem:[#allocation5 + $0xf8] sm:$0xff]
    %v388 = vld [vmem:[#allocation5 + $0x100] sm:$0xff]
    %v389 = vld [vmem:[#allocation5 + $0x108] sm:$0xff]
    %v390 = vld [vmem:[#allocation5 + $0x110] sm:$0xff]
    %v391 = vld [vmem:[#allocation5 + $0x118] sm:$0xff]
    %v392 = vld [vmem:[#allocation5 + $0x120] sm:$0xff]
    %v393 = vld [vmem:[#allocation5 + $0x128] sm:$0xff]
    %v394 = vld [vmem:[#allocation5 + $0x130] sm:$0xff]
    %v395 = vld [vmem:[#allocation5 + $0x138] sm:$0xff]
    %v396 = vld [vmem:[#allocation5 + $0x140] sm:$0xff]
    %v397 = vld [vmem:[#allocation5 + $0x148] sm:$0xff]
    %v398 = vld [vmem:[#allocation5 + $0x150] sm:$0xff]
    %v399 = vld [vmem:[#allocation5 + $0x158] sm:$0xff]
    %v400 = vld [vmem:[#allocation5 + $0x160] sm:$0xff]
    %v401 = vld [vmem:[#allocation5 + $0x168] sm:$0xff]
    %v402 = vld [vmem:[#allocation5 + $0x170] sm:$0xff]
    %v403 = vld [vmem:[#allocation5 + $0x178] sm:$0xff]
    %v404 = vld [vmem:[#allocation5 + $0x180] sm:$0xff]
    %v405 = vld [vmem:[#allocation5 + $0x188] sm:$0xff]
    %v406 = vld [vmem:[#allocation5 + $0x190] sm:$0xff]
    %v407 = vld [vmem:[#allocation5 + $0x198] sm:$0xff]
    %v408 = vld [vmem:[#allocation5 + $0x1a0] sm:$0xff]
    %v409 = vld [vmem:[#allocation5 + $0x1a8] sm:$0xff]
    %v410 = vld [vmem:[#allocation5 + $0x1b0] sm:$0xff]
    %v411 = vld [vmem:[#allocation5 + $0x1b8] sm:$0xff]
    %v412 = vld [vmem:[#allocation5 + $0x1c0] sm:$0xff]
    %v413 = vld [vmem:[#allocation5 + $0x1c8] sm:$0xff]
    %v414 = vld [vmem:[#allocation5 + $0x1d0] sm:$0xff]
    %v415 = vld [vmem:[#allocation5 + $0x1d8] sm:$0xff]
    %v416 = vld [vmem:[#allocation5 + $0x1e0] sm:$0xff]
    %v417 = vld [vmem:[#allocation5 + $0x1e8] sm:$0xff]
    %v418 = vld [vmem:[#allocation5 + $0x1f0] sm:$0xff]
    %v419 = vld [vmem:[#allocation5 + $0x1f8] sm:$0xff]
    %v420 = vlaneseq
    %v421 = vshrl.u32 %v420, 7
    %v422 = vsub.s32 0, %v421
    %v423 = vrot.slane %v59, %v422
    %424 = vmatprep.subr.mxu0 0.0
    %425 = vmatpush1.msra.mxu0 %v371
    %426 = vmatprep.subr.mxu0 0.0
    %427 = vmatpush1.msra.mxu0 %v370
    %428 = vmatprep.subr.mxu0 0.0
    %429 = vmatpush1.msra.mxu0 %v369
    %430 = vmatprep.subr.mxu0 0.0
    %431 = vmatpush1.msra.mxu0 %v368
    %432 = vmatprep.subr.mxu0 0.0
    %433 = vmatpush1.msra.mxu0 %v367
    %434 = vmatprep.subr.mxu0 0.0
    %435 = vmatpush1.msra.mxu0 %v366
    %436 = vmatprep.subr.mxu0 0.0
    %437 = vmatpush1.msra.mxu0 %v365
    %438 = vmatprep.subr.mxu0 0.0
    %439 = vmatpush1.msra.mxu0 %v364
    %440 = vmatprep.subr.mxu0 0.0
    %441 = vmatpush1.msra.mxu0 %v363
    %442 = vmatprep.subr.mxu0 0.0
    %443 = vmatpush1.msra.mxu0 %v362
    %444 = vmatprep.subr.mxu0 0.0
    %445 = vmatpush1.msra.mxu0 %v361
    %446 = vmatprep.subr.mxu0 0.0
    %447 = vmatpush1.msra.mxu0 %v360
    %448 = vmatprep.subr.mxu0 0.0
    %449 = vmatpush1.msra.mxu0 %v359
    %450 = vmatprep.subr.mxu0 0.0
    %451 = vmatpush1.msra.mxu0 %v358
    %452 = vmatprep.subr.mxu0 0.0
    %453 = vmatpush1.msra.mxu0 %v357
    %454 = vmatprep.subr.mxu0 0.0
    %455 = vmatpush1.msra.mxu0 %v356
    %456 = vmatprep.subr.mxu0 0.0
    %457 = vmatpush2.msra.mxu0 %v387
    %458 = vmatprep.subr.mxu0 0.0
    %459 = vmatpush2.msra.mxu0 %v386
    %460 = vmatprep.subr.mxu0 0.0
    %461 = vmatpush2.msra.mxu0 %v385
    %462 = vmatprep.subr.mxu0 0.0
    %463 = vmatpush2.msra.mxu0 %v384
    %464 = vmatprep.subr.mxu0 0.0
    %465 = vmatpush2.msra.mxu0 %v383
    %466 = vmatprep.subr.mxu0 0.0
    %467 = vmatpush2.msra.mxu0 %v382
    %468 = vmatprep.subr.mxu0 0.0
    %469 = vmatpush2.msra.mxu0 %v381
    %470 = vmatprep.subr.mxu0 0.0
    %471 = vmatpush2.msra.mxu0 %v380
    %472 = vmatprep.subr.mxu0 0.0
    %473 = vmatpush2.msra.mxu0 %v379
    %474 = vmatprep.subr.mxu0 0.0
    %475 = vmatpush2.msra.mxu0 %v378
    %476 = vmatprep.subr.mxu0 0.0
    %477 = vmatpush2.msra.mxu0 %v377
    %478 = vmatprep.subr.mxu0 0.0
    %479 = vmatpush2.msra.mxu0 %v376
    %480 = vmatprep.subr.mxu0 0.0
    %481 = vmatpush2.msra.mxu0 %v375
    %482 = vmatprep.subr.mxu0 0.0
    %483 = vmatpush2.msra.mxu0 %v374
    %484 = vmatprep.subr.mxu0 0.0
    %485 = vmatpush2.msra.mxu0 %v373
    %486 = vmatprep.subr.mxu0 0.0
    %487 = vmatpush2.msra.mxu0 %v372
    %488 = vmatprep.mubr.f32.mxu0 %v353
    %489 = vmatmul.mubr.f32.gmra.mxu0 %v352
    %v490 = vpop.f32.mrf.mxu0
    %v491 = vadd.f32 %v423, %v490
    %v492 = vpop.f32.mrf.mxu0
    %493 = vdwg.mxu0
    %494 = vmatprep.subr.mxu0 0.0
    %495 = vmatpush1.msra.mxu0 %v403
    %496 = vmatprep.subr.mxu0 0.0
    %497 = vmatpush1.msra.mxu0 %v402
    %498 = vmatprep.subr.mxu0 0.0
    %499 = vmatpush1.msra.mxu0 %v401
    %500 = vmatprep.subr.mxu0 0.0
    %501 = vmatpush1.msra.mxu0 %v400
    %502 = vmatprep.subr.mxu0 0.0
    %503 = vmatpush1.msra.mxu0 %v399
    %504 = vmatprep.subr.mxu0 0.0
    %505 = vmatpush1.msra.mxu0 %v398
    %506 = vmatprep.subr.mxu0 0.0
    %507 = vmatpush1.msra.mxu0 %v397
    %508 = vmatprep.subr.mxu0 0.0
    %509 = vmatpush1.msra.mxu0 %v396
    %510 = vmatprep.subr.mxu0 0.0
    %511 = vmatpush1.msra.mxu0 %v395
    %512 = vmatprep.subr.mxu0 0.0
    %513 = vmatpush1.msra.mxu0 %v394
    %514 = vmatprep.subr.mxu0 0.0
    %515 = vmatpush1.msra.mxu0 %v393
    %516 = vmatprep.subr.mxu0 0.0
    %517 = vmatpush1.msra.mxu0 %v392
    %518 = vmatprep.subr.mxu0 0.0
    %519 = vmatpush1.msra.mxu0 %v391
    %520 = vmatprep.subr.mxu0 0.0
    %521 = vmatpush1.msra.mxu0 %v390
    %522 = vmatprep.subr.mxu0 0.0
    %523 = vmatpush1.msra.mxu0 %v389
    %524 = vmatprep.subr.mxu0 0.0
    %525 = vmatpush1.msra.mxu0 %v388
    %526 = vmatprep.subr.mxu0 0.0
    %527 = vmatpush2.msra.mxu0 %v419
    %528 = vmatprep.subr.mxu0 0.0
    %529 = vmatpush2.msra.mxu0 %v418
    %530 = vmatprep.subr.mxu0 0.0
    %531 = vmatpush2.msra.mxu0 %v417
    %532 = vmatprep.subr.mxu0 0.0
    %533 = vmatpush2.msra.mxu0 %v416
    %534 = vmatprep.subr.mxu0 0.0
    %535 = vmatpush2.msra.mxu0 %v415
    %536 = vmatprep.subr.mxu0 0.0
    %537 = vmatpush2.msra.mxu0 %v414
    %538 = vmatprep.subr.mxu0 0.0
    %539 = vmatpush2.msra.mxu0 %v413
    %540 = vmatprep.subr.mxu0 0.0
    %541 = vmatpush2.msra.mxu0 %v412
    %542 = vmatprep.subr.mxu0 0.0
    %543 = vmatpush2.msra.mxu0 %v411
    %544 = vmatprep.subr.mxu0 0.0
    %545 = vmatpush2.msra.mxu0 %v410
    %546 = vmatprep.subr.mxu0 0.0
    %547 = vmatpush2.msra.mxu0 %v409
    %548 = vmatprep.subr.mxu0 0.0
    %549 = vmatpush2.msra.mxu0 %v408
    %550 = vmatprep.subr.mxu0 0.0
    %551 = vmatpush2.msra.mxu0 %v407
    %552 = vmatprep.subr.mxu0 0.0
    %553 = vmatpush2.msra.mxu0 %v406
    %554 = vmatprep.subr.mxu0 0.0
    %555 = vmatpush2.msra.mxu0 %v405
    %556 = vmatprep.subr.mxu0 0.0
    %557 = vmatpush2.msra.mxu0 %v404
    %558 = vmatprep.mubr.f32.mxu0 %v355
    %559 = vmatmul.mubr.f32.gmra.mxu0 %v354
    %v560 = vpop.f32.mrf.mxu0
    %v561 = vadd.f32 %v491, %v560
    %v562 = vpop.f32.mrf.mxu0
    %563 = vdwg.mxu0
    %564 = vst [vmem:[#allocation8] sm:$0x3] %v561
    // Predicated region
    $region26: #{tpu_custom_call.1} parent=1 // pred_check
      _
    $region27: #{tpu_custom_call.1} parent=1 // pred_check_branch
      %566 = sbr.rel (0) target = $region29
    $region28: #{tpu_custom_call.1} parent=1 // pred_region
      %s568 = ssub.s32 32, 32
      %569 = vsyncadd [#allocation4], %s568
      %s571 = sshll.u32 [#allocation8], 4
      %s572 = int_to_ptr.vmem [resolvable:$true] %s571
      %574 = dma.vmem_to_hbm [thread:$0]  %s572, 32, %s3, [#allocation4]
    $region29: #{tpu_custom_call.1} parent=1 // pred_fallthru
      _
    // Predicated region
    $region30: #{tpu_custom_call.1} parent=1 // pred_check
      _
    $region31: #{tpu_custom_call.1} parent=1 // pred_check_branch
      %576 = sbr.rel (0) target = $region33
    $region32: #{tpu_custom_call.1} parent=1 // pred_region
      %577 = dma.done [#allocation4], 32
    $region33: #{tpu_custom_call.1} parent=1 // pred_fallthru
      _
    %578 = vsyncpa [#allocation3], 1
    %579 = vsyncpa [#allocation6], 1
    %580 = vsyncpa [#allocation4], 1

</llo_original>
